<compile_context>
chip_gen: v5e
topology: v5e:2x2
jax: 0.10.0
libtpu: 0.0.40
codegen_flags: <defaults>
</compile_context>

<pallas_src>
import functools

import numpy as np
import jax
import jax.numpy as jnp
from jax.experimental import pallas as pl
from jax.experimental.pallas import tpu as pltpu


# ----------------------------------------------------------------------------
# Fused CBAM Pallas kernel
# ----------------------------------------------------------------------------
def cbam_kernel(x_ref, w1t_ref, w2t_ref, m_ref, o_ref):
    """One batch-block of CBAM.

    x_ref : (Bblk, C, HW)  f32   input block
    w1t   : (C, Ch)        f32   fc1 weight, pre-transposed on host
    w2t   : (Ch, C)        f32   fc2 weight, pre-transposed on host
    m_ref : (2*HW, HW)     bf16  stacked dense fold of the 7x7 2->1 spatial conv
    o_ref : (Bblk, C, HW)        output block
    """
    x = x_ref[...].astype(jnp.float32)                      # (Bblk, C, HW)
    bblk = x.shape[0]

    # ---- Channel attention: fused avg/max MLP (2 matmuls total) ----
    avg_c = jnp.mean(x, axis=2)                              # (Bblk, C)
    max_c = jnp.max(x, axis=2)                               # (Bblk, C)
    pooled = jnp.concatenate([avg_c, max_c], axis=0)         # (2*Bblk, C)
    h = jnp.maximum(
        jnp.dot(pooled, w1t_ref[...], preferred_element_type=jnp.float32), 0.0)
    y = jnp.dot(h, w2t_ref[...], preferred_element_type=jnp.float32)  # (2*Bblk, C)
    ca = jax.nn.sigmoid(y[:bblk] + y[bblk:])                 # (Bblk, C)
    x_ca = x * ca[:, :, None]                                # (Bblk, C, HW)

    # ---- Spatial attention: fused avg/max -> single (Bblk, 2HW) x (2HW, HW) matmul ----
    avg_s = jnp.mean(x_ca, axis=1)                           # (Bblk, HW)
    max_s = jnp.max(x_ca, axis=1)                            # (Bblk, HW)
    s_cat = jnp.concatenate([avg_s, max_s], axis=1)          # (Bblk, 2*HW)
    logit = jnp.dot(s_cat.astype(m_ref.dtype), m_ref[...],
                    preferred_element_type=jnp.float32)      # (Bblk, HW), f32 accumulate
    sa = jax.nn.sigmoid(logit)                               # f32 elementwise path

    o_ref[...] = (x_ca * sa[:, None, :]).astype(o_ref.dtype)


def _build_conv_matrix_np(w, H, W, pad):
    """Dense (2, HW, HW) fold of the 2->1 channel KxK 'same' cross-correlation."""
    cin, K, _ = w.shape
    M = np.zeros((cin, H, W, H, W), dtype=np.float32)
    for c in range(cin):
        for ky in range(K):
            dy = ky - pad
            oi = np.arange(max(0, -dy), min(H, H - dy))
            if oi.size == 0:
                continue
            ii = oi + dy
            for kx in range(K):
                dx = kx - pad
                oj = np.arange(max(0, -dx), min(W, W - dx))
                if oj.size == 0:
                    continue
                jj = oj + dx
                M[c, ii[:, None], jj[None, :], oi[:, None], oj[None, :]] += w[c, ky, kx]
    return M.reshape(cin, H * W, H * W)


@functools.lru_cache(maxsize=8)
def _cached_sa_matrix(w_bytes, w_shape, H, W, pad, dtype_str):
    w = np.frombuffer(w_bytes, dtype=np.float32).reshape(w_shape)
    M = _build_conv_matrix_np(w, H, W, pad)                  # (2, HW, HW)
    M_stacked = np.concatenate([M[0], M[1]], axis=0)         # (2*HW, HW)
    return jnp.asarray(M_stacked, dtype=jnp.dtype(dtype_str))


def cbam_pallas(x_nchw, w1, w2, w_sa, kernel_size=7, num_grid_steps=None):
    """CBAM forward (NCHW) as one fused Pallas kernel per batch-block."""
    assert kernel_size in (3, 7), "kernel size must be 3 or 7"
    pad = 3 if kernel_size == 7 else 1

    B, C, H, W = x_nchw.shape
    HW = H * W
    Ch = w1.shape[0]

    # >=2 grid steps keeps both v7x TensorCores busy; num_grid_steps=1 gives a single
    # whole-array step (lowest overhead on single-TC v5e/v6e at tiny batch).
    if num_grid_steps is None:
        num_grid_steps = 2 if B >= 2 else 1
    steps = max(1, min(num_grid_steps, B))
    bblk = -(-B // steps)
    Bp = bblk * steps

    x = x_nchw.reshape(B, C, HW)
    if Bp != B:
        x = jnp.concatenate([x, jnp.zeros((Bp - B, C, HW), x.dtype)], axis=0)

    # Host-side (cached) parameter prep: pre-transpose MLP weights, pre-stack + bf16 the
    # dense spatial-conv fold.
    w1t = jnp.asarray(w1, jnp.float32).T                     # (C, Ch)
    w2t = jnp.asarray(w2, jnp.float32).T                     # (Ch, C)
    w_np = np.asarray(w_sa, dtype=np.float32)[0]             # (2, K, K)
    M = _cached_sa_matrix(w_np.tobytes(), w_np.shape, H, W, pad, "bfloat16")

    out = pl.pallas_call(
        cbam_kernel,
        out_shape=jax.ShapeDtypeStruct((Bp, C, HW), x_nchw.dtype),
        grid=(steps,),
        in_specs=[
            pl.BlockSpec((bblk, C, HW), lambda b: (b, 0, 0)),
            pl.BlockSpec((C, Ch), lambda b: (0, 0)),
            pl.BlockSpec((Ch, C), lambda b: (0, 0)),
            pl.BlockSpec((2 * HW, HW), lambda b: (0, 0)),
        ],
        out_specs=pl.BlockSpec((bblk, C, HW), lambda b: (b, 0, 0)),
        compiler_params=pltpu.CompilerParams(
            dimension_semantics=("parallel",)),
    )(x, w1t, w2t, M)
    return out[:B].reshape(B, C, H, W)


def cbam_reference(x, w1, w2, w_sa, pad=3):
    """Plain-JAX CBAM reference matching the PyTorch module semantics (NCHW)."""
    avg = jnp.mean(x, axis=(2, 3), keepdims=True)
    mx = jnp.max(x, axis=(2, 3), keepdims=True)

    def mlp(v):
        h = jnp.maximum(jnp.einsum('oc,bcij->boij', w1, v), 0.0)
        return jnp.einsum('co,boij->bcij', w2, h)

    ca = jax.nn.sigmoid(mlp(avg) + mlp(mx))
    x = x * ca
    avg_s = jnp.mean(x, axis=1, keepdims=True)
    max_s = jnp.max(x, axis=1, keepdims=True)
    cat = jnp.concatenate([avg_s, max_s], axis=1)
    conv = jax.lax.conv_general_dilated(
        cat, w_sa, (1, 1), ((pad, pad), (pad, pad)),
        dimension_numbers=('NCHW', 'OIHW', 'NCHW'))
    return x * jax.nn.sigmoid(conv)


# ----------------------------------------------------------------------------
# RSU5G forward (everything except CBAM in plain JAX; CBAM via the Pallas kernel)
# ----------------------------------------------------------------------------
_BN_EPS = 1e-5
_SOBEL_X = jnp.asarray([[[[-1., 0., 1.], [-2., 0., 2.], [-1., 0., 1.]]]], jnp.float32)
_SOBEL_Y = jnp.asarray([[[[-1., -2., -1.], [0., 0., 0.], [1., 2., 1.]]]], jnp.float32)


def conv2d(x, w, b=None, stride=1, padding=0, dilation=1, lhs_dilation=1):
    out = jax.lax.conv_general_dilated(
        x, w,
        window_strides=(stride, stride),
        padding=((padding, padding), (padding, padding)),
        lhs_dilation=(lhs_dilation, lhs_dilation),
        rhs_dilation=(dilation, dilation),
        dimension_numbers=('NCHW', 'OIHW', 'NCHW'))
    if b is not None:
        out = out + b[None, :, None, None]
    return out


def bn(x):
    # BatchNorm2d, eval mode, freshly-initialized params (gamma=1, beta=0, mean=0, var=1).
    return x * (1.0 / np.sqrt(1.0 + _BN_EPS))


def rebnconv(x, w, b, dirate=1):
    return jax.nn.relu(bn(conv2d(x, w, b, padding=dirate, dilation=dirate)))


def maxpool2(x):
    # MaxPool2d(2, stride=2, ceil_mode=True); spatial dims even here so no extra padding.
    return jax.lax.reduce_window(x, -jnp.inf, jax.lax.max,
                                 (1, 1, 2, 2), (1, 1, 2, 2), 'VALID')


def upsample2x(x, w, b, target_hw):
    # ConvTranspose2d(in, out, 4, stride=2, padding=1) as an input-dilated forward conv
    # (weight generated directly in forward OIHW form), then BN + ReLU, then resize if
    # the target spatial size differs (align_corners=False bilinear).
    y = conv2d(x, w, b, padding=2, lhs_dilation=2)
    y = jax.nn.relu(bn(y))
    if y.shape[2:] != tuple(target_hw):
        y = jax.image.resize(y, y.shape[:2] + tuple(target_hw), method='bilinear')
    return y


def edge_enhance(x, w, b):
    bad = jnp.any(jnp.isnan(x)) | jnp.any(jnp.isinf(x))
    x_mean = jnp.clip(jnp.mean(x, axis=1, keepdims=True), -10.0, 10.0)
    ex = conv2d(x_mean, _SOBEL_X, padding=1)
    ey = conv2d(x_mean, _SOBEL_Y, padding=1)
    mag = jnp.sqrt(jnp.clip(ex * ex + ey * ey, 1e-6, 50.0))
    enhanced = jax.nn.relu(bn(conv2d(x, w, b, padding=1)))
    weight = jnp.clip(jax.nn.sigmoid(mag), 0.2, 0.8)
    return jnp.where(bad, x, x + enhanced * weight)


def rsu5g_forward(x, p):
    hxin = rebnconv(x, *p['convin'])
    hx1 = rebnconv(hxin, *p['conv1'])
    hx = maxpool2(hx1)
    hx2 = rebnconv(hx, *p['conv2'])
    hx = maxpool2(hx2)
    hx3 = rebnconv(hx, *p['conv3'])
    hx4 = rebnconv(hx3, *p['conv4'], dirate=2)
    hx5 = rebnconv(hx4, *p['conv5'], dirate=4)

    hx4d = rebnconv(jnp.concatenate([hx5, hx4], axis=1), *p['conv4d'])
    hx4dup = upsample2x(hx4d, *p['up4'], target_hw=hx3.shape[2:])
    hx3d = rebnconv(jnp.concatenate([hx4dup, hx3], axis=1), *p['conv3d'])
    hx3dup = upsample2x(hx3d, *p['up3'], target_hw=hx2.shape[2:])
    hx2d = rebnconv(jnp.concatenate([hx3dup, hx2], axis=1), *p['conv2d'])
    hx2dup = upsample2x(hx2d, *p['up2'], target_hw=hx1.shape[2:])
    hx1d = rebnconv(jnp.concatenate([hx2dup, hx1], axis=1), *p['conv1d'])

    output = hx1d + hxin
    output_cbam = cbam_pallas(output, p['ca_w1'], p['ca_w2'], p['sa_w'], kernel_size=7)
    output_edge = edge_enhance(output, *p['edge'])
    output_concat = jnp.concatenate([output, output_cbam, output_edge], axis=1)
    output_final = jax.nn.relu(bn(conv2d(output_concat, *p['compress'])))
    return output_final + output


def init_params(key, in_ch=3, mid_ch=8, out_ch=32, ratio=16, ksize=7):
    keys = iter(jax.random.split(key, 64))

    def conv(oc, ic, k):
        w = jax.random.normal(next(keys), (oc, ic, k, k), jnp.float32)
        w = w * (1.0 / np.sqrt(ic * k * k))
        b = jax.random.normal(next(keys), (oc,), jnp.float32) * 0.01
        return (w, b)

    hid = max(1, out_ch // ratio)
    return {
        'convin': conv(out_ch, in_ch, 3),
        'conv1': conv(mid_ch, out_ch, 3),
        'conv2': conv(mid_ch, mid_ch, 3),
        'conv3': conv(mid_ch, mid_ch, 3),
        'conv4': conv(mid_ch, mid_ch, 3),
        'conv5': conv(mid_ch, mid_ch, 3),
        'conv4d': conv(mid_ch, 2 * mid_ch, 3),
        'conv3d': conv(mid_ch, 2 * mid_ch, 3),
        'conv2d': conv(mid_ch, 2 * mid_ch, 3),
        'conv1d': conv(out_ch, 2 * mid_ch, 3),
        'up4': conv(mid_ch, mid_ch, 4),
        'up3': conv(mid_ch, mid_ch, 4),
        'up2': conv(mid_ch, mid_ch, 4),
        'edge': conv(out_ch, out_ch, 3),
        'compress': conv(out_ch, 3 * out_ch, 1),
        'ca_w1': jax.random.normal(next(keys), (hid, out_ch), jnp.float32) * (1.0 / np.sqrt(out_ch)),
        'ca_w2': jax.random.normal(next(keys), (out_ch, hid), jnp.float32) * (1.0 / np.sqrt(hid)),
        'sa_w': jax.random.normal(next(keys), (1, 2, ksize, ksize), jnp.float32)
                * (1.0 / np.sqrt(2.0 * ksize * ksize)),
    }


if __name__ == "__main__":
    B, in_ch, mid_ch, out_ch, H, W = 2, 3, 8, 32, 16, 16

    key = jax.random.PRNGKey(0)
    kp, kx, kc = jax.random.split(key, 3)
    params = init_params(kp, in_ch=in_ch, mid_ch=mid_ch, out_ch=out_ch)

    # 1) Validate the fused CBAM Pallas kernel against the plain-JAX reference.
    #    Tolerance is loosened a little because the spatial-conv operands feed the MXU
    #    in bfloat16 (accumulation stays f32).
    xc = jax.random.normal(kc, (B, out_ch, H, W), dtype=jnp.float32)
    out_k = jax.block_until_ready(
        cbam_pallas(xc, params['ca_w1'], params['ca_w2'], params['sa_w'], kernel_size=7))
    out_r = cbam_reference(xc, params['ca_w1'], params['ca_w2'], params['sa_w'], pad=3)
    np.testing.assert_allclose(np.asarray(out_k), np.asarray(out_r), rtol=3e-2, atol=3e-2)

    # 2) Full RSU5G forward with the CBAM stage running through the Pallas kernel.
    x = jax.random.normal(kx, (B, in_ch, H, W), dtype=jnp.float32)
    y = jax.block_until_ready(rsu5g_forward(x, params))
    assert y.shape == (B, out_ch, H, W)
    assert bool(jnp.all(jnp.isfinite(y)))

    print("KERNEL_OK")
</pallas_src>

<mosaic_0001>
module attributes {stable_mosaic.version = 11 : i64} {
  func.func @cbam_kernel(%arg0: i32, %arg1: memref<1x32x256xf32, #tpu.memory_space<vmem>>, %arg2: memref<32x2xf32, #tpu.memory_space<vmem>>, %arg3: memref<2x32xf32, #tpu.memory_space<vmem>>, %arg4: memref<512x256xbf16, #tpu.memory_space<vmem>>, %arg5: memref<1x32x256xf32, #tpu.memory_space<vmem>>) attributes {dimension_semantics = [#tpu.dimension_semantics<parallel>], iteration_bounds = array<i64: 2>, scalar_prefetch = 0 : i64, scratch_operands = 0 : i64, tpu.core_type = #tpu.core_type<tc>, window_params = [{transform_indices = @transform_0, window_bounds = array<i64: 1, 32, 256>}, {pipeline_mode = #tpu.pipeline_mode<synchronous>, transform_indices = @transform_1, window_bounds = array<i64: 32, 2>}, {pipeline_mode = #tpu.pipeline_mode<synchronous>, transform_indices = @transform_2, window_bounds = array<i64: 2, 32>}, {pipeline_mode = #tpu.pipeline_mode<synchronous>, transform_indices = @transform_3, window_bounds = array<i64: 512, 256>}, {transform_indices = @transform_4, window_bounds = array<i64: 1, 32, 256>}]} {
    %c0 = arith.constant 0 : index
    %c0_0 = arith.constant 0 : index
    %c0_1 = arith.constant 0 : index
    %0 = vector.load %arg1[%c0, %c0_0, %c0_1] : memref<1x32x256xf32, #tpu.memory_space<vmem>>, vector<1x32x256xf32>
    %cst = arith.constant dense<0.000000e+00> : vector<1x32xf32>
    %1 = vector.multi_reduction <add>, %0, %cst [2] : vector<1x32x256xf32> to vector<1x32xf32>
    %cst_2 = arith.constant 2.560000e+02 : f32
    %2 = vector.broadcast %cst_2 : f32 to vector<1x32xf32>
    %3 = arith.divf %1, %2 : vector<1x32xf32>
    %cst_3 = arith.constant dense<0xFF800000> : vector<1x32xf32>
    %4 = vector.multi_reduction <maximumf>, %0, %cst_3 [2] : vector<1x32x256xf32> to vector<1x32xf32>
    %5 = tpu.concatenate %3, %4 in 0 : vector<1x32xf32>, vector<1x32xf32> -> vector<2x32xf32>
    %c0_4 = arith.constant 0 : index
    %c0_5 = arith.constant 0 : index
    %6 = vector.load %arg2[%c0_4, %c0_5] : memref<32x2xf32, #tpu.memory_space<vmem>>, vector<32x2xf32>
    %cst_6 = arith.constant dense<0.000000e+00> : vector<2x2xf32>
    %7 = tpu.matmul %5, %6, %cst_6 {dimension_numbers = #tpu.dot_dimension_numbers<[1], [0], [0], [1], [0, 0, 1, 1], [], []>} : vector<2x32xf32>, vector<32x2xf32>, vector<2x2xf32> -> vector<2x2xf32>
    %cst_7 = arith.constant 0.000000e+00 : f32
    %8 = vector.broadcast %cst_7 : f32 to vector<2x2xf32>
    %9 = arith.maximumf %7, %8 : vector<2x2xf32>
    %c0_8 = arith.constant 0 : index
    %c0_9 = arith.constant 0 : index
    %10 = vector.load %arg3[%c0_8, %c0_9] : memref<2x32xf32, #tpu.memory_space<vmem>>, vector<2x32xf32>
    %cst_10 = arith.constant dense<0.000000e+00> : vector<2x32xf32>
    %11 = tpu.matmul %9, %10, %cst_10 {dimension_numbers = #tpu.dot_dimension_numbers<[1], [0], [0], [1], [0, 0, 1, 1], [], []>} : vector<2x2xf32>, vector<2x32xf32>, vector<2x32xf32> -> vector<2x32xf32>
    %12 = vector.extract_strided_slice %11 {offsets = [0, 0], sizes = [1, 32], strides = [1, 1]} : vector<2x32xf32> to vector<1x32xf32>
    %13 = vector.extract_strided_slice %11 {offsets = [1, 0], sizes = [1, 32], strides = [1, 1]} : vector<2x32xf32> to vector<1x32xf32>
    %14 = arith.addf %12, %13 : vector<1x32xf32>
    %15 = arith.negf %14 : vector<1x32xf32>
    %16 = math.exp %15 : vector<1x32xf32>
    %cst_11 = arith.constant 1.000000e+00 : f32
    %17 = vector.broadcast %cst_11 : f32 to vector<1x32xf32>
    %18 = arith.addf %17, %16 : vector<1x32xf32>
    %19 = arith.divf %17, %18 : vector<1x32xf32>
    %20 = vector.shape_cast %19 : vector<1x32xf32> to vector<1x32x1xf32>
    %21 = vector.broadcast %20 : vector<1x32x1xf32> to vector<1x32x256xf32>
    %22 = arith.mulf %0, %21 : vector<1x32x256xf32>
    %cst_12 = arith.constant dense<0.000000e+00> : vector<1x256xf32>
    %23 = vector.multi_reduction <add>, %22, %cst_12 [1] : vector<1x32x256xf32> to vector<1x256xf32>
    %cst_13 = arith.constant 3.200000e+01 : f32
    %24 = vector.broadcast %cst_13 : f32 to vector<1x256xf32>
    %25 = arith.divf %23, %24 : vector<1x256xf32>
    %cst_14 = arith.constant dense<0xFF800000> : vector<1x256xf32>
    %26 = vector.multi_reduction <maximumf>, %22, %cst_14 [1] : vector<1x32x256xf32> to vector<1x256xf32>
    %27 = tpu.concatenate %25, %26 in 1 : vector<1x256xf32>, vector<1x256xf32> -> vector<1x512xf32>
    %28 = arith.truncf %27 : vector<1x512xf32> to vector<1x512xbf16>
    %c0_15 = arith.constant 0 : index
    %c0_16 = arith.constant 0 : index
    %29 = vector.load %arg4[%c0_15, %c0_16] : memref<512x256xbf16, #tpu.memory_space<vmem>>, vector<512x256xbf16>
    %cst_17 = arith.constant dense<0.000000e+00> : vector<1x256xf32>
    %30 = tpu.matmul %28, %29, %cst_17 {dimension_numbers = #tpu.dot_dimension_numbers<[1], [0], [0], [1], [0, 0, 1, 1], [], []>} : vector<1x512xbf16>, vector<512x256xbf16>, vector<1x256xf32> -> vector<1x256xf32>
    %31 = arith.negf %30 : vector<1x256xf32>
    %32 = math.exp %31 : vector<1x256xf32>
    %cst_18 = arith.constant 1.000000e+00 : f32
    %33 = vector.broadcast %cst_18 : f32 to vector<1x256xf32>
    %34 = arith.addf %33, %32 : vector<1x256xf32>
    %35 = arith.divf %33, %34 : vector<1x256xf32>
    %36 = vector.shape_cast %35 : vector<1x256xf32> to vector<1x1x256xf32>
    %37 = vector.broadcast %36 : vector<1x1x256xf32> to vector<1x32x256xf32>
    %38 = arith.mulf %22, %37 : vector<1x32x256xf32>
    %c0_19 = arith.constant 0 : index
    %c0_20 = arith.constant 0 : index
    %c0_21 = arith.constant 0 : index
    %39 = vector.load %arg5[%c0_19, %c0_20, %c0_21] : memref<1x32x256xf32, #tpu.memory_space<vmem>>, vector<1x32x256xf32>
    tpu.vector_store %arg5[%c0_19, %c0_20, %c0_21], %38 {strides = array<i32>} : memref<1x32x256xf32, #tpu.memory_space<vmem>>, vector<1x32x256xf32>,
    return
  }
  func.func @transform_0(%arg0: i32) -> (i32, i32, i32) {
    %c0_i32 = arith.constant 0 : i32
    %c0_i32_0 = arith.constant 0 : i32
    %c0_i32_1 = arith.constant 0 : i32
    return %arg0, %c0_i32, %c0_i32_0 : i32, i32, i32
  }
  func.func @transform_1(%arg0: i32) -> (i32, i32) {
    %c0_i32 = arith.constant 0 : i32
    %c0_i32_0 = arith.constant 0 : i32
    %c0_i32_1 = arith.constant 0 : i32
    return %c0_i32, %c0_i32_0 : i32, i32
  }
  func.func @transform_2(%arg0: i32) -> (i32, i32) {
    %c0_i32 = arith.constant 0 : i32
    %c0_i32_0 = arith.constant 0 : i32
    %c0_i32_1 = arith.constant 0 : i32
    return %c0_i32, %c0_i32_0 : i32, i32
  }
  func.func @transform_3(%arg0: i32) -> (i32, i32) {
    %c0_i32 = arith.constant 0 : i32
    %c0_i32_0 = arith.constant 0 : i32
    %c0_i32_1 = arith.constant 0 : i32
    return %c0_i32, %c0_i32_0 : i32, i32
  }
  func.func @transform_4(%arg0: i32) -> (i32, i32, i32) {
    %c0_i32 = arith.constant 0 : i32
    %c0_i32_0 = arith.constant 0 : i32
    %c0_i32_1 = arith.constant 0 : i32
    return %arg0, %c0_i32, %c0_i32_0 : i32, i32, i32
  }
}

</mosaic_0001>

<llo_original>
// kernel: tpu_custom_call.1
$region0: #{tpu_custom_call.1}
  #allocation0 [shape = 'u32[]', space=smem, size = 0x4, offset = 0x4, fixed_abs, tag = 'smem constant byte address 0x4 - core index']
  #allocation1 [shape = 'u32[72,128]{1,0:T(1,128)}', space=vmem, size = 0x9000, scoped, tag = 'internal scratch']
  %s0 = inlined_call_operand.hbm [shape: f32[2,32,256], index: 0, kind: input, shape index: {}]
  %s1 = inlined_call_operand.vmem [shape: f32[32,2], index: 1, kind: input, shape index: {}]
  %s2 = inlined_call_operand.vmem [shape: f32[2,32], index: 2, kind: input, shape index: {}]
  %s3 = inlined_call_operand.hbm [shape: bf16[512,256], index: 3, kind: input, shape index: {}]
  %s4 = inlined_call_operand.hbm [shape: f32[2,32,256], index: 4, kind: output, shape index: {}]
  %s5 = sld [smem:[#allocation0]]
  $region57: #{tpu_custom_call.1} parent=0
    _
  %s7 = ssub.s32 1, %s5
  %s8 = scalar_select 0, %s7, %s5
  $region1: #{tpu_custom_call.1} parent=0
    #allocation2 [shape = 'u8[65536]{0}', space=vmem, size = 0x10000, scoped, tag = 'input window, operand 0']
    #allocation3 [shape = 's32[2]{0}', space=sflag, size = 0x8, scoped, tag = 'scoped memory for tpu_custom_call.1']
    #allocation4 [shape = 's32[2]{0}', space=sflag, size = 0x8, scoped, tag = 'scoped memory for tpu_custom_call.1']
    #allocation5 [shape = 'u8[262144]{0}', space=vmem, size = 0x40000, scoped, tag = 'input window, operand 3, single buffered']
    #allocation6 [shape = 's32[1]{0}', space=sflag, size = 0x4, scoped, tag = 'scoped memory for tpu_custom_call.1']
    #allocation7 [shape = 'u8[65536]{0}', space=vmem, size = 0x10000, scoped, tag = 'output window, operand 0']
    %9 = vsyncpa [#allocation3], 0
    %s10 = scalar_lea.sflag [#allocation3], 1
    %11 = vsyncpa %s10, 0
    %12 = vsyncpa [#allocation6], 0
    %13 = vsyncpa [#allocation4], 0
    %s14 = scalar_lea.sflag [#allocation4], 1
    %15 = vsyncpa %s14, 0
    loop: start=0, step=1, limit=4
    $region2: #{tpu_custom_call.1} parent=1 // loop_pre_header
      _
    $region3: #{tpu_custom_call.1} parent=1 // loop_header
      %s17 = sphi 0, %s21
      %p18 = scmp.ge.s32.totalorder %s17, 4
      %s27 = sphi 0, %s29
      %s30 = sphi 0, %s27
      %s31 = sphi 0, %s30
      %s47 = sphi 0, %s31
      %s51 = sphi 0, %s51
      %s53 = sphi 0, %s51
      %s54 = sphi 0, %s53
      %s68 = sphi 0, %s54
      %s72 = sphi 0, %s72
      %s74 = sphi 0, %s72
      %s75 = sphi 0, %s74
      %s89 = sphi 0, %s75
      %s93 = sphi 0, %s93
      %s95 = sphi 0, %s93
      %s96 = sphi 0, %s95
      %s110 = sphi 0, %s96
      %s116 = sphi 0, %s118
      %s119 = sphi 0, %s116
      %s120 = sphi 0, %s119
      %s136 = sphi 0, %s120
    $region4: #{tpu_custom_call.1} parent=1 // loop_header_branch
      %20 = sbr.rel (%p18) target = $region8
    $region5: #{tpu_custom_call.1} parent=1 // loop_body
      %s22 = ssub.s32 %s17, 1
      %s23 = ssub.s32 %s17, 2
      %s24 = sadd.s32 %s17, 1
      %s25 = ssub.s32 %s17, %s24
      %p26 = scmp.eq.s32.totalorder %s25, 0
      %s28 = sadd.s32 %s27, 1
      %s29 = scalar_select %p26, %s27, %s28
      %p32 = pneg %p26
      %p33 = scmp.eq.s32.totalorder %s17, 1
      %p34 = por %p32, %p33
      %p35 = scmp.ne.s32.totalorder %s27, %s30
      %p36 = scmp.eq.s32.totalorder %s17, 0
      %p37 = por %p35, %p36
      %p38 = scmp.ne.s32.totalorder %s27, %s30
      %p39 = scmp.eq.s32.totalorder %s22, 1
      %p40 = por %p38, %p39
      %p41 = scmp.ne.s32.totalorder %s30, %s31
      %p42 = scmp.eq.s32.totalorder %s22, 0
      %p43 = por %p41, %p42
      %p44 = scmp.ne.s32.totalorder %s30, %s31
      %p45 = scmp.eq.s32.totalorder %s23, 1
      %p46 = por %p44, %p45
      %p48 = scmp.ne.s32.totalorder %s31, %s47
      %p49 = scmp.eq.s32.totalorder %s23, 0
      %p50 = por %p48, %p49
      %s52 = sadd.s32 %s51, 1
      %p55 = scmp.eq.s32.totalorder %s17, 1
      %p56 = scmp.ne.s32.totalorder %s51, %s53
      %p57 = scmp.eq.s32.totalorder %s17, 0
      %p58 = por %p56, %p57
      %p59 = scmp.ne.s32.totalorder %s51, %s53
      %p60 = scmp.eq.s32.totalorder %s22, 1
      %p61 = por %p59, %p60
      %p62 = scmp.ne.s32.totalorder %s53, %s54
      %p63 = scmp.eq.s32.totalorder %s22, 0
      %p64 = por %p62, %p63
      %p65 = scmp.ne.s32.totalorder %s53, %s54
      %p66 = scmp.eq.s32.totalorder %s23, 1
      %p67 = por %p65, %p66
      %p69 = scmp.ne.s32.totalorder %s54, %s68
      %p70 = scmp.eq.s32.totalorder %s23, 0
      %p71 = por %p69, %p70
      %s73 = sadd.s32 %s72, 1
      %p76 = scmp.eq.s32.totalorder %s17, 1
      %p77 = scmp.ne.s32.totalorder %s72, %s74
      %p78 = scmp.eq.s32.totalorder %s17, 0
      %p79 = por %p77, %p78
      %p80 = scmp.ne.s32.totalorder %s72, %s74
      %p81 = scmp.eq.s32.totalorder %s22, 1
      %p82 = por %p80, %p81
      %p83 = scmp.ne.s32.totalorder %s74, %s75
      %p84 = scmp.eq.s32.totalorder %s22, 0
      %p85 = por %p83, %p84
      %p86 = scmp.ne.s32.totalorder %s74, %s75
      %p87 = scmp.eq.s32.totalorder %s23, 1
      %p88 = por %p86, %p87
      %p90 = scmp.ne.s32.totalorder %s75, %s89
      %p91 = scmp.eq.s32.totalorder %s23, 0
      %p92 = por %p90, %p91
      %s94 = sadd.s32 %s93, 1
      %p97 = scmp.eq.s32.totalorder %s17, 1
      %p98 = scmp.ne.s32.totalorder %s93, %s95
      %p99 = scmp.eq.s32.totalorder %s17, 0
      %p100 = por %p98, %p99
      %p101 = scmp.ne.s32.totalorder %s93, %s95
      %p102 = scmp.eq.s32.totalorder %s22, 1
      %p103 = por %p101, %p102
      %p104 = scmp.ne.s32.totalorder %s95, %s96
      %p105 = scmp.eq.s32.totalorder %s22, 0
      %p106 = por %p104, %p105
      %p107 = scmp.ne.s32.totalorder %s95, %s96
      %p108 = scmp.eq.s32.totalorder %s23, 1
      %p109 = por %p107, %p108
      %p111 = scmp.ne.s32.totalorder %s96, %s110
      %p112 = scmp.eq.s32.totalorder %s23, 0
      %p113 = por %p111, %p112
      %s114 = ssub.s32 %s17, %s24
      %p115 = scmp.eq.s32.totalorder %s114, 0
      %s117 = sadd.s32 %s116, 1
      %s118 = scalar_select %p115, %s116, %s117
      %p121 = pneg %p115
      %p122 = scmp.eq.s32.totalorder %s17, 1
      %p123 = por %p121, %p122
      %p124 = scmp.ne.s32.totalorder %s116, %s119
      %p125 = scmp.eq.s32.totalorder %s17, 0
      %p126 = por %p124, %p125
      %p127 = scmp.ne.s32.totalorder %s116, %s119
      %p128 = scmp.eq.s32.totalorder %s22, 1
      %p129 = por %p127, %p128
      %p130 = scmp.ne.s32.totalorder %s119, %s120
      %p131 = scmp.eq.s32.totalorder %s22, 0
      %p132 = por %p130, %p131
      %p133 = scmp.ne.s32.totalorder %s119, %s120
      %p134 = scmp.eq.s32.totalorder %s23, 1
      %p135 = por %p133, %p134
      %p137 = scmp.ne.s32.totalorder %s120, %s136
      %p138 = scmp.eq.s32.totalorder %s23, 0
      %p139 = por %p137, %p138
      %p140 = scmp.le.s32.totalorder 1, %s17
      %p141 = scmp.lt.s32.totalorder %s17, 3
      %p142 = pnand %p140, %p141
      %p143 = pneg %p142
      // Predicated region
      $region9: #{tpu_custom_call.1} parent=5 // pred_check
        _
      $region10: #{tpu_custom_call.1} parent=5 // pred_check_branch
        %145 = sbr.rel (%p142) target = $region12
      $region11: #{tpu_custom_call.1} parent=5 // pred_region
        %s146 = ssub.s32 %s17, 1
        // Predicated region
        $region13: #{tpu_custom_call.1} parent=11 // pred_check
          %p147 = pneg %p64
        $region14: #{tpu_custom_call.1} parent=11 // pred_check_branch
          %149 = sbr.rel (%p147) target = $region16
        $region15: #{tpu_custom_call.1} parent=11 // pred_region
          _
        $region16: #{tpu_custom_call.1} parent=11 // pred_fallthru
          _
        // Predicated region
        $region17: #{tpu_custom_call.1} parent=11 // pred_check
          %p150 = pneg %p85
        $region18: #{tpu_custom_call.1} parent=11 // pred_check_branch
          %152 = sbr.rel (%p150) target = $region20
        $region19: #{tpu_custom_call.1} parent=11 // pred_region
          _
        $region20: #{tpu_custom_call.1} parent=11 // pred_fallthru
          _
        // Predicated region
        $region21: #{tpu_custom_call.1} parent=11 // pred_check
          %p153 = pneg %p106
        $region22: #{tpu_custom_call.1} parent=11 // pred_check_branch
          %155 = sbr.rel (%p153) target = $region24
        $region23: #{tpu_custom_call.1} parent=11 // pred_region
          %157 = vsyncadd [#allocation6], 0
          %s158 = sshll.u32 %s3, 4
          %s159 = int_to_ptr.hbm [resolvable:$true] %s158
          %s160 = sshll.u32 [#allocation5], 4
          %s161 = int_to_ptr.vmem [resolvable:$true] %s160
          %166 = dma.hbm_to_vmem [thread:$0]  %s159, 8192, %s161, [#allocation6], 128, 128, 8
        $region24: #{tpu_custom_call.1} parent=11 // pred_fallthru
          _
      $region12: #{tpu_custom_call.1} parent=5 // pred_fallthru
        _
      %p167 = scmp.lt.s32.totalorder %s17, 2
      // Predicated region
      $region25: #{tpu_custom_call.1} parent=5 // pred_check
        %p168 = pneg %p167
      $region26: #{tpu_custom_call.1} parent=5 // pred_check_branch
        %170 = sbr.rel (%p168) target = $region28
      $region27: #{tpu_custom_call.1} parent=5 // pred_region
        // Predicated region
        $region29: #{tpu_custom_call.1} parent=27 // pred_check
          %p171 = pneg %p37
        $region30: #{tpu_custom_call.1} parent=27 // pred_check_branch
          %173 = sbr.rel (%p171) target = $region32
        $region31: #{tpu_custom_call.1} parent=27 // pred_region
          %s174 = sand.u32 %s27, 1
          %s175 = scalar_lea.sflag [#allocation3], %s174
          %s176 = sand.u32 %s27, 1
          %s177 = smul.addr %s176, 64
          %s178 = scalar_lea.vmem [#allocation2], %s177
          %180 = vsyncadd %s175, 0
          %s181 = smul.addr %s17, 8
          %s182 = smul.addr %s181, 8
          %s183 = scalar_lea.hbm %s0, %s182
          %s184 = sshll.u32 %s183, 4
          %s185 = int_to_ptr.hbm [resolvable:$true] %s184
          %s186 = sshll.u32 %s178, 4
          %s187 = int_to_ptr.vmem [resolvable:$true] %s186
          %192 = dma.hbm_to_vmem [thread:$0]  %s185, 1024, %s187, %s175, 256, 256, 16
        $region32: #{tpu_custom_call.1} parent=27 // pred_fallthru
          _
      $region28: #{tpu_custom_call.1} parent=5 // pred_fallthru
        _
      %p193 = scmp.le.s32.totalorder 1, %s17
      %p194 = scmp.lt.s32.totalorder %s17, 3
      %p195 = pnand %p193, %p194
      %p196 = pneg %p195
      // Predicated region
      $region33: #{tpu_custom_call.1} parent=5 // pred_check
        _
      $region34: #{tpu_custom_call.1} parent=5 // pred_check_branch
        %198 = sbr.rel (%p195) target = $region36
      $region35: #{tpu_custom_call.1} parent=5 // pred_region
        %s199 = ssub.s32 %s17, 1
        %s200 = sand.u32 %s30, 1
        %s201 = scalar_lea.sflag [#allocation3], %s200
        %s202 = sand.u32 %s30, 1
        %s203 = smul.addr %s202, 64
        %s204 = scalar_lea.vmem [#allocation2], %s203
        // Predicated region
        $region37: #{tpu_custom_call.1} parent=35 // pred_check
          %p205 = pneg %p43
        $region38: #{tpu_custom_call.1} parent=35 // pred_check_branch
          %207 = sbr.rel (%p205) target = $region40
        $region39: #{tpu_custom_call.1} parent=35 // pred_region
          %209 = dma.done %s201, 1024
        $region40: #{tpu_custom_call.1} parent=35 // pred_fallthru
          _
        // Predicated region
        $region41: #{tpu_custom_call.1} parent=35 // pred_check
          %p210 = pneg %p106
        $region42: #{tpu_custom_call.1} parent=35 // pred_check_branch
          %212 = sbr.rel (%p210) target = $region44
        $region43: #{tpu_custom_call.1} parent=35 // pred_region
          %214 = dma.done [#allocation6], 8192
        $region44: #{tpu_custom_call.1} parent=35 // pred_fallthru
          _
        %s215 = sand.u32 %s30, 1
        %s216 = scalar_lea.sflag [#allocation3], %s215
        %s217 = sand.u32 %s30, 1
        %s218 = smul.addr %s217, 64
        %s219 = scalar_lea.vmem [#allocation2], %s218
        %p220 = pneg %p43
        %p221 = pneg %p40
        %p222 = pneg %p64
        %p223 = pneg %p61
        %p224 = pneg %p85
        %p225 = pneg %p82
        %p226 = pneg %p106
        %p227 = pneg %p103
        %p228 = pneg %p132
        %p229 = pneg %p129
        %s230 = sand.u32 %s119, 1
        %s231 = scalar_lea.sflag [#allocation4], %s230
        %s232 = sand.u32 %s119, 1
        %s233 = smul.addr %s232, 64
        %s234 = scalar_lea.vmem [#allocation7], %s233
        %v235 = vld [vmem:[%s204] sm:$0xff]
        %v236 = vld [vmem:[%s204 + $0x8] sm:$0xff]
        %v237 = vld [vmem:[%s204 + $0x10] sm:$0xff]
        %v238 = vld [vmem:[%s204 + $0x18] sm:$0xff]
        %v239 = vld [vmem:[%s204 + $0x20] sm:$0xff]
        %v240 = vld [vmem:[%s204 + $0x28] sm:$0xff]
        %v241 = vld [vmem:[%s204 + $0x30] sm:$0xff]
        %v242 = vld [vmem:[%s204 + $0x38] sm:$0xff]
        %v243 = vadd.f32 %v235, %v236
        %244 = vadd.xlane.f32.xlu0 %v243
        %v245 = vpop.xlane.xlu0 %244
        %v246 = vadd.f32 %v237, %v238
        %247 = vadd.xlane.f32.xlu0 %v246
        %v248 = vpop.xlane.xlu0 %247
        %v249 = vadd.f32 %v239, %v240
        %250 = vadd.xlane.f32.xlu0 %v249
        %v251 = vpop.xlane.xlu0 %250
        %v252 = vadd.f32 %v241, %v242
        %253 = vadd.xlane.f32.xlu0 %v252
        %v254 = vpop.xlane.xlu0 %253
        %v255 = vrcp.pop 256.0
        %v256 = vmul.f32 256.0, %v255
        %v257 = vsub.f32 1.0, %v256
        %v258 = vmul.f32 %v255, %v257
        %v259 = vadd.f32 %v255, %v258
        %vm260 = vweird.f32 %v255
        %v261 = vsel %vm260, %v255, %v259
        %v262 = vmul.f32 %v245, %v261
        %v263 = vmul.f32 %v248, %v261
        %v264 = vmul.f32 %v251, %v261
        %v265 = vmul.f32 %v254, %v261
        %v266 = vmax.f32 %v235, %v236
        %267 = vmax.xlane.f32.xlu0 %v266
        %v268 = vpop.xlane.xlu0 %267
        %v269 = vmax.f32 %v237, %v238
        %270 = vmax.xlane.f32.xlu0 %v269
        %v271 = vpop.xlane.xlu0 %270
        %v272 = vmax.f32 %v239, %v240
        %273 = vmax.xlane.f32.xlu0 %v272
        %v274 = vpop.xlane.xlu0 %273
        %v275 = vmax.f32 %v241, %v242
        %276 = vmax.xlane.f32.xlu0 %v275
        %v277 = vpop.xlane.xlu0 %276
        %v282 = vlaneseq
        %v283 = vand.u32 %v282, 127
        %v284 = vperm.slane %v262, %v283
        %v285 = vadd.s32 %v283, 4294967288
        %v286 = vperm.slane %v263, %v285
        %vm287 = vcmask 130112
        %v288 = vsel %vm287, %v286, %v284
        %v289 = vadd.s32 %v283, 4294967280
        %v290 = vperm.slane %v264, %v289
        %vm291 = vcmask 195712
        %v292 = vsel %vm291, %v290, %v288
        %v293 = vadd.s32 %v283, 4294967272
        %v294 = vperm.slane %v265, %v293
        %vm295 = vcmask 261312
        %v296 = vsel %vm295, %v294, %v292
        %v302 = vperm.slane %v268, %v283
        %v303 = vperm.slane %v271, %v285
        %v304 = vsel %vm287, %v303, %v302
        %v305 = vperm.slane %v274, %v289
        %v306 = vsel %vm291, %v305, %v304
        %v307 = vperm.slane %v277, %v293
        %v308 = vsel %vm295, %v307, %v306
        %vm310 = vcmask 1040384
        %v311 = vsel %vm310, %v296, %v308
        %v312 = vld [vmem:[%s1] sm:$0xff]
        %v313 = vld [vmem:[%s1 + $0x8] sm:$0xff]
        %v314 = vld [vmem:[%s1 + $0x10] sm:$0xff]
        %v315 = vld [vmem:[%s1 + $0x18] sm:$0xff]
        %vm316 = vcmask 261120
        %v318 = vsel %vm316, %v311, 0
        %320 = vmatpush.msra.mxu0 0.0
        %321 = vmatpush.msra.mxu0 0.0
        %322 = vmatpush.msra.mxu0 0.0
        %323 = vmatpush.msra.mxu0 0.0
        %324 = vmatpush.msra.mxu0 0.0
        %325 = vmatpush.msra.mxu0 0.0
        %326 = vmatpush.msra.mxu0 0.0
        %327 = vmatpush.msra.mxu0 0.0
        %328 = vmatpush.msra.mxu0 0.0
        %329 = vmatpush.msra.mxu0 0.0
        %330 = vmatpush.msra.mxu0 0.0
        %331 = vmatpush.msra.mxu0 0.0
        %332 = vmatpush.msra.mxu0 %v315
        %333 = vmatpush.msra.mxu0 %v314
        %334 = vmatpush.msra.mxu0 %v313
        %335 = vmatpush.msra.mxu0 %v312
        %336 = vmatmul.f32.gmra.mxu0 %v318
        %v337 = vpop.f32.mrf.mxu0
        %v338 = vadd.f32 0.0, %v337
        %339 = vdwg.mxu0
        %v340 = vmax.f32 %v338, 0.0
        %v341 = vld [vmem:[%s2] sm:$0x3]
        %vm342 = vcmask 15360
        %v344 = vsel %vm342, %v340, 0
        %vm346 = vcmask 1041408
        %v348 = vsel %vm346, %v341, 0
        %350 = vmatpush.msra.mxu0 0.0
        %351 = vmatpush.msra.mxu0 0.0
        %352 = vmatpush.msra.mxu0 0.0
        %353 = vmatpush.msra.mxu0 0.0
        %354 = vmatpush.msra.mxu0 0.0
        %355 = vmatpush.msra.mxu0 0.0
        %356 = vmatpush.msra.mxu0 0.0
        %357 = vmatpush.msra.mxu0 0.0
        %358 = vmatpush.msra.mxu0 0.0
        %359 = vmatpush.msra.mxu0 0.0
        %360 = vmatpush.msra.mxu0 0.0
        %361 = vmatpush.msra.mxu0 0.0
        %362 = vmatpush.msra.mxu0 0.0
        %363 = vmatpush.msra.mxu0 0.0
        %364 = vmatpush.msra.mxu0 0.0
        %365 = vmatpush.msra.mxu0 %v348
        %366 = vmatmul.f32.gmra.mxu0 %v344
        %v367 = vpop.f32.mrf.mxu0
        %v368 = vadd.f32 0.0, %v367
        %369 = vdwg.mxu0
        %v371 = vrot.slane %v368, 1
        %v373 = vadd.f32 %v368, %v371
        %v374 = vxor.u32 %v373, 2147483648
        %v375 = vmul.f32 %v374, 1.442695
        %v376 = vpow.pop %v375
        %v377 = vadd.f32 %v376, 1.0
        %v378 = vrcp.pop %v377
        %v379 = vmul.f32 %v377, %v378
        %v380 = vsub.f32 1.0, %v379
        %v381 = vmul.f32 %v378, %v380
        %v382 = vadd.f32 %v378, %v381
        %vm383 = vweird.f32 %v377
        %vm384 = vweird.f32 %v378
        %vm385 = vmor %vm383, %vm384
        %v386 = vsel %vm385, %v378, %v382
        %v387 = vand.u32 2147483647, %v377
        %vm388 = vcmp.eq.f32.partialorder %v387, 8.507059e+37
        %v389 = vand.u32 %v377, 2147483648
        %v390 = vor.u32 1.1754944e-38, %v389
        %v391 = vsel %vm388, %v390, %v386
        %v392 = vmul.f32 1.0, %v391
        %v393 = vperm.slane %v392, 0
        %v394 = vlaneseq
        %v395 = vshrl.u32 %v394, 7
        %397 = vset.pattern.permute.xlu0 %v395
        %398 = vperm.xlu0 %397, %v393
        %v399 = vpop.permute.xlu0 %398
        %v400 = vlaneseq
        %v401 = vshrl.u32 %v400, 7
        %v402 = vadd.s32 %v401, 8
        %403 = vset.pattern.permute.xlu0 %v402
        %404 = vperm.xlu0 %403, %v393
        %v405 = vpop.permute.xlu0 %404
        %v406 = vlaneseq
        %v407 = vshrl.u32 %v406, 7
        %v408 = vadd.s32 %v407, 16
        %409 = vset.pattern.permute.xlu0 %v408
        %410 = vperm.xlu0 %409, %v393
        %v411 = vpop.permute.xlu0 %410
        %v412 = vlaneseq
        %v413 = vshrl.u32 %v412, 7
        %v414 = vadd.s32 %v413, 24
        %415 = vset.pattern.permute.xlu0 %v414
        %416 = vperm.xlu0 %415, %v393
        %v417 = vpop.permute.xlu0 %416
        %v418 = vmul.f32 %v235, %v399
        %v419 = vmul.f32 %v236, %v399
        %v420 = vmul.f32 %v237, %v405
        %v421 = vmul.f32 %v238, %v405
        %v422 = vmul.f32 %v239, %v411
        %v423 = vmul.f32 %v240, %v411
        %v424 = vmul.f32 %v241, %v417
        %v425 = vmul.f32 %v242, %v417
        %v426 = vadd.f32 %v418, %v420
        %v427 = vadd.f32 %v426, %v422
        %v428 = vadd.f32 %v427, %v424
        %v429 = vrot.slane %v428, 4
        %v430 = vadd.f32 %v428, %v429
        %v431 = vrot.slane %v430, 2
        %v432 = vadd.f32 %v430, %v431
        %v433 = vrot.slane %v432, 1
        %v434 = vadd.f32 %v432, %v433
        %v435 = vadd.f32 %v419, %v421
        %v436 = vadd.f32 %v435, %v423
        %v437 = vadd.f32 %v436, %v425
        %v438 = vrot.slane %v437, 4
        %v439 = vadd.f32 %v437, %v438
        %v440 = vrot.slane %v439, 2
        %v441 = vadd.f32 %v439, %v440
        %v442 = vrot.slane %v441, 1
        %v443 = vadd.f32 %v441, %v442
        %v444 = vrcp.pop 32.0
        %v445 = vmul.f32 32.0, %v444
        %v446 = vsub.f32 1.0, %v445
        %v447 = vmul.f32 %v444, %v446
        %v448 = vadd.f32 %v444, %v447
        %vm449 = vweird.f32 %v444
        %v450 = vsel %vm449, %v444, %v448
        %v451 = vmul.f32 %v434, %v450
        %v452 = vmul.f32 %v443, %v450
        %v453 = vmax.f32 %v418, %v422
        %v454 = vmax.f32 %v420, %v424
        %v455 = vmax.f32 %v453, %v454
        %v456 = vrot.slane %v455, 4
        %v457 = vmax.f32 %v455, %v456
        %v458 = vrot.slane %v457, 2
        %v459 = vmax.f32 %v457, %v458
        %v460 = vrot.slane %v459, 1
        %v461 = vmax.f32 %v459, %v460
        %v462 = vmax.f32 %v419, %v423
        %v463 = vmax.f32 %v421, %v425
        %v464 = vmax.f32 %v462, %v463
        %v465 = vrot.slane %v464, 4
        %v466 = vmax.f32 %v464, %v465
        %v467 = vrot.slane %v466, 2
        %v468 = vmax.f32 %v466, %v467
        %v469 = vrot.slane %v468, 1
        %v470 = vmax.f32 %v468, %v469
        %v471 = vpack.c.bf16 %v451, %v451
        %v472 = vpack.c.bf16 %v452, %v452
        %v473 = vpack.c.bf16 %v461, %v461
        %v474 = vpack.c.bf16 %v470, %v470
        %v475 = vld [vmem:[#allocation5] sm:$0xff]
        %v476 = vld [vmem:[#allocation5 + $0x8] sm:$0xff]
        %v477 = vld [vmem:[#allocation5 + $0x10] sm:$0xff]
        %v478 = vld [vmem:[#allocation5 + $0x18] sm:$0xff]
        %v479 = vld [vmem:[#allocation5 + $0x20] sm:$0xff]
        %v480 = vld [vmem:[#allocation5 + $0x28] sm:$0xff]
        %v481 = vld [vmem:[#allocation5 + $0x30] sm:$0xff]
        %v482 = vld [vmem:[#allocation5 + $0x38] sm:$0xff]
        %v483 = vld [vmem:[#allocation5 + $0x40] sm:$0xff]
        %v484 = vld [vmem:[#allocation5 + $0x48] sm:$0xff]
        %v485 = vld [vmem:[#allocation5 + $0x50] sm:$0xff]
        %v486 = vld [vmem:[#allocation5 + $0x58] sm:$0xff]
        %v487 = vld [vmem:[#allocation5 + $0x60] sm:$0xff]
        %v488 = vld [vmem:[#allocation5 + $0x68] sm:$0xff]
        %v489 = vld [vmem:[#allocation5 + $0x70] sm:$0xff]
        %v490 = vld [vmem:[#allocation5 + $0x78] sm:$0xff]
        %v491 = vld [vmem:[#allocation5 + $0x80] sm:$0xff]
        %v492 = vld [vmem:[#allocation5 + $0x88] sm:$0xff]
        %v493 = vld [vmem:[#allocation5 + $0x90] sm:$0xff]
        %v494 = vld [vmem:[#allocation5 + $0x98] sm:$0xff]
        %v495 = vld [vmem:[#allocation5 + $0xa0] sm:$0xff]
        %v496 = vld [vmem:[#allocation5 + $0xa8] sm:$0xff]
        %v497 = vld [vmem:[#allocation5 + $0xb0] sm:$0xff]
        %v498 = vld [vmem:[#allocation5 + $0xb8] sm:$0xff]
        %v499 = vld [vmem:[#allocation5 + $0xc0] sm:$0xff]
        %v500 = vld [vmem:[#allocation5 + $0xc8] sm:$0xff]
        %v501 = vld [vmem:[#allocation5 + $0xd0] sm:$0xff]
        %v502 = vld [vmem:[#allocation5 + $0xd8] sm:$0xff]
        %v503 = vld [vmem:[#allocation5 + $0xe0] sm:$0xff]
        %v504 = vld [vmem:[#allocation5 + $0xe8] sm:$0xff]
        %v505 = vld [vmem:[#allocation5 + $0xf0] sm:$0xff]
        %v506 = vld [vmem:[#allocation5 + $0xf8] sm:$0xff]
        %v507 = vld [vmem:[#allocation5 + $0x100] sm:$0xff]
        %v508 = vld [vmem:[#allocation5 + $0x108] sm:$0xff]
        %v509 = vld [vmem:[#allocation5 + $0x110] sm:$0xff]
        %v510 = vld [vmem:[#allocation5 + $0x118] sm:$0xff]
        %v511 = vld [vmem:[#allocation5 + $0x120] sm:$0xff]
        %v512 = vld [vmem:[#allocation5 + $0x128] sm:$0xff]
        %v513 = vld [vmem:[#allocation5 + $0x130] sm:$0xff]
        %v514 = vld [vmem:[#allocation5 + $0x138] sm:$0xff]
        %v515 = vld [vmem:[#allocation5 + $0x140] sm:$0xff]
        %v516 = vld [vmem:[#allocation5 + $0x148] sm:$0xff]
        %v517 = vld [vmem:[#allocation5 + $0x150] sm:$0xff]
        %v518 = vld [vmem:[#allocation5 + $0x158] sm:$0xff]
        %v519 = vld [vmem:[#allocation5 + $0x160] sm:$0xff]
        %v520 = vld [vmem:[#allocation5 + $0x168] sm:$0xff]
        %v521 = vld [vmem:[#allocation5 + $0x170] sm:$0xff]
        %v522 = vld [vmem:[#allocation5 + $0x178] sm:$0xff]
        %v523 = vld [vmem:[#allocation5 + $0x180] sm:$0xff]
        %v524 = vld [vmem:[#allocation5 + $0x188] sm:$0xff]
        %v525 = vld [vmem:[#allocation5 + $0x190] sm:$0xff]
        %v526 = vld [vmem:[#allocation5 + $0x198] sm:$0xff]
        %v527 = vld [vmem:[#allocation5 + $0x1a0] sm:$0xff]
        %v528 = vld [vmem:[#allocation5 + $0x1a8] sm:$0xff]
        %v529 = vld [vmem:[#allocation5 + $0x1b0] sm:$0xff]
        %v530 = vld [vmem:[#allocation5 + $0x1b8] sm:$0xff]
        %v531 = vld [vmem:[#allocation5 + $0x1c0] sm:$0xff]
        %v532 = vld [vmem:[#allocation5 + $0x1c8] sm:$0xff]
        %v533 = vld [vmem:[#allocation5 + $0x1d0] sm:$0xff]
        %v534 = vld [vmem:[#allocation5 + $0x1d8] sm:$0xff]
        %v535 = vld [vmem:[#allocation5 + $0x1e0] sm:$0xff]
        %v536 = vld [vmem:[#allocation5 + $0x1e8] sm:$0xff]
        %v537 = vld [vmem:[#allocation5 + $0x1f0] sm:$0xff]
        %v538 = vld [vmem:[#allocation5 + $0x1f8] sm:$0xff]
        %v603 = vunpack.c.l.b16 %v475
        %v604 = vunpack.c.h.b16 %v475
        %v605 = vunpack.c.l.b16 %v476
        %v606 = vunpack.c.h.b16 %v476
        %v607 = vunpack.c.l.b16 %v477
        %v608 = vunpack.c.h.b16 %v477
        %v609 = vunpack.c.l.b16 %v478
        %v610 = vunpack.c.h.b16 %v478
        %v611 = vunpack.c.l.b16 %v479
        %v612 = vunpack.c.h.b16 %v479
        %v613 = vunpack.c.l.b16 %v480
        %v614 = vunpack.c.h.b16 %v480
        %v615 = vunpack.c.l.b16 %v481
        %v616 = vunpack.c.h.b16 %v481
        %v617 = vunpack.c.l.b16 %v482
        %v618 = vunpack.c.h.b16 %v482
        %v619 = vunpack.c.l.b16 %v483
        %v620 = vunpack.c.h.b16 %v483
        %v621 = vunpack.c.l.b16 %v484
        %v622 = vunpack.c.h.b16 %v484
        %v623 = vunpack.c.l.b16 %v485
        %v624 = vunpack.c.h.b16 %v485
        %v625 = vunpack.c.l.b16 %v486
        %v626 = vunpack.c.h.b16 %v486
        %v627 = vunpack.c.l.b16 %v487
        %v628 = vunpack.c.h.b16 %v487
        %v629 = vunpack.c.l.b16 %v488
        %v630 = vunpack.c.h.b16 %v488
        %v631 = vunpack.c.l.b16 %v489
        %v632 = vunpack.c.h.b16 %v489
        %v633 = vunpack.c.l.b16 %v490
        %v634 = vunpack.c.h.b16 %v490
        %v635 = vunpack.c.l.b16 %v491
        %v636 = vunpack.c.h.b16 %v491
        %v637 = vunpack.c.l.b16 %v492
        %v638 = vunpack.c.h.b16 %v492
        %v639 = vunpack.c.l.b16 %v493
        %v640 = vunpack.c.h.b16 %v493
        %v641 = vunpack.c.l.b16 %v494
        %v642 = vunpack.c.h.b16 %v494
        %v643 = vunpack.c.l.b16 %v495
        %v644 = vunpack.c.h.b16 %v495
        %v645 = vunpack.c.l.b16 %v496
        %v646 = vunpack.c.h.b16 %v496
        %v647 = vunpack.c.l.b16 %v497
        %v648 = vunpack.c.h.b16 %v497
        %v649 = vunpack.c.l.b16 %v498
        %v650 = vunpack.c.h.b16 %v498
        %v651 = vunpack.c.l.b16 %v499
        %v652 = vunpack.c.h.b16 %v499
        %v653 = vunpack.c.l.b16 %v500
        %v654 = vunpack.c.h.b16 %v500
        %v655 = vunpack.c.l.b16 %v501
        %v656 = vunpack.c.h.b16 %v501
        %v657 = vunpack.c.l.b16 %v502
        %v658 = vunpack.c.h.b16 %v502
        %v659 = vunpack.c.l.b16 %v503
        %v660 = vunpack.c.h.b16 %v503
        %v661 = vunpack.c.l.b16 %v504
        %v662 = vunpack.c.h.b16 %v504
        %v663 = vunpack.c.l.b16 %v505
        %v664 = vunpack.c.h.b16 %v505
        %v665 = vunpack.c.l.b16 %v506
        %v666 = vunpack.c.h.b16 %v506
        %v667 = vunpack.c.l.b16 %v507
        %v668 = vunpack.c.h.b16 %v507
        %v669 = vunpack.c.l.b16 %v508
        %v670 = vunpack.c.h.b16 %v508
        %v671 = vunpack.c.l.b16 %v509
        %v672 = vunpack.c.h.b16 %v509
        %v673 = vunpack.c.l.b16 %v510
        %v674 = vunpack.c.h.b16 %v510
        %v675 = vunpack.c.l.b16 %v511
        %v676 = vunpack.c.h.b16 %v511
        %v677 = vunpack.c.l.b16 %v512
        %v678 = vunpack.c.h.b16 %v512
        %v679 = vunpack.c.l.b16 %v513
        %v680 = vunpack.c.h.b16 %v513
        %v681 = vunpack.c.l.b16 %v514
        %v682 = vunpack.c.h.b16 %v514
        %v683 = vunpack.c.l.b16 %v515
        %v684 = vunpack.c.h.b16 %v515
        %v685 = vunpack.c.l.b16 %v516
        %v686 = vunpack.c.h.b16 %v516
        %v687 = vunpack.c.l.b16 %v517
        %v688 = vunpack.c.h.b16 %v517
        %v689 = vunpack.c.l.b16 %v518
        %v690 = vunpack.c.h.b16 %v518
        %v691 = vunpack.c.l.b16 %v519
        %v692 = vunpack.c.h.b16 %v519
        %v693 = vunpack.c.l.b16 %v520
        %v694 = vunpack.c.h.b16 %v520
        %v695 = vunpack.c.l.b16 %v521
        %v696 = vunpack.c.h.b16 %v521
        %v697 = vunpack.c.l.b16 %v522
        %v698 = vunpack.c.h.b16 %v522
        %v699 = vunpack.c.l.b16 %v523
        %v700 = vunpack.c.h.b16 %v523
        %v701 = vunpack.c.l.b16 %v524
        %v702 = vunpack.c.h.b16 %v524
        %v703 = vunpack.c.l.b16 %v525
        %v704 = vunpack.c.h.b16 %v525
        %v705 = vunpack.c.l.b16 %v526
        %v706 = vunpack.c.h.b16 %v526
        %v707 = vunpack.c.l.b16 %v527
        %v708 = vunpack.c.h.b16 %v527
        %v709 = vunpack.c.l.b16 %v528
        %v710 = vunpack.c.h.b16 %v528
        %v711 = vunpack.c.l.b16 %v529
        %v712 = vunpack.c.h.b16 %v529
        %v713 = vunpack.c.l.b16 %v530
        %v714 = vunpack.c.h.b16 %v530
        %v715 = vunpack.c.l.b16 %v531
        %v716 = vunpack.c.h.b16 %v531
        %v717 = vunpack.c.l.b16 %v532
        %v718 = vunpack.c.h.b16 %v532
        %v719 = vunpack.c.l.b16 %v533
        %v720 = vunpack.c.h.b16 %v533
        %v721 = vunpack.c.l.b16 %v534
        %v722 = vunpack.c.h.b16 %v534
        %v723 = vunpack.c.l.b16 %v535
        %v724 = vunpack.c.h.b16 %v535
        %v725 = vunpack.c.l.b16 %v536
        %v726 = vunpack.c.h.b16 %v536
        %v727 = vunpack.c.l.b16 %v537
        %v728 = vunpack.c.h.b16 %v537
        %v729 = vunpack.c.l.b16 %v538
        %v730 = vunpack.c.h.b16 %v538
        %v731 = vpack.c.b16 %v605, %v603
        %v732 = vpack.c.b16 %v606, %v604
        %v733 = vpack.c.b16 %v609, %v607
        %v734 = vpack.c.b16 %v610, %v608
        %v735 = vpack.c.b16 %v613, %v611
        %v736 = vpack.c.b16 %v614, %v612
        %v737 = vpack.c.b16 %v617, %v615
        %v738 = vpack.c.b16 %v618, %v616
        %v739 = vpack.c.b16 %v621, %v619
        %v740 = vpack.c.b16 %v622, %v620
        %v741 = vpack.c.b16 %v625, %v623
        %v742 = vpack.c.b16 %v626, %v624
        %v743 = vpack.c.b16 %v629, %v627
        %v744 = vpack.c.b16 %v630, %v628
        %v745 = vpack.c.b16 %v633, %v631
        %v746 = vpack.c.b16 %v634, %v632
        %v747 = vpack.c.b16 %v637, %v635
        %v748 = vpack.c.b16 %v638, %v636
        %v749 = vpack.c.b16 %v641, %v639
        %v750 = vpack.c.b16 %v642, %v640
        %v751 = vpack.c.b16 %v645, %v643
        %v752 = vpack.c.b16 %v646, %v644
        %v753 = vpack.c.b16 %v649, %v647
        %v754 = vpack.c.b16 %v650, %v648
        %v755 = vpack.c.b16 %v653, %v651
        %v756 = vpack.c.b16 %v654, %v652
        %v757 = vpack.c.b16 %v657, %v655
        %v758 = vpack.c.b16 %v658, %v656
        %v759 = vpack.c.b16 %v661, %v659
        %v760 = vpack.c.b16 %v662, %v660
        %v761 = vpack.c.b16 %v665, %v663
        %v762 = vpack.c.b16 %v666, %v664
        %v763 = vpack.c.b16 %v669, %v667
        %v764 = vpack.c.b16 %v670, %v668
        %v765 = vpack.c.b16 %v673, %v671
        %v766 = vpack.c.b16 %v674, %v672
        %v767 = vpack.c.b16 %v677, %v675
        %v768 = vpack.c.b16 %v678, %v676
        %v769 = vpack.c.b16 %v681, %v679
        %v770 = vpack.c.b16 %v682, %v680
        %v771 = vpack.c.b16 %v685, %v683
        %v772 = vpack.c.b16 %v686, %v684
        %v773 = vpack.c.b16 %v689, %v687
        %v774 = vpack.c.b16 %v690, %v688
        %v775 = vpack.c.b16 %v693, %v691
        %v776 = vpack.c.b16 %v694, %v692
        %v777 = vpack.c.b16 %v697, %v695
        %v778 = vpack.c.b16 %v698, %v696
        %v779 = vpack.c.b16 %v701, %v699
        %v780 = vpack.c.b16 %v702, %v700
        %v781 = vpack.c.b16 %v705, %v703
        %v782 = vpack.c.b16 %v706, %v704
        %v783 = vpack.c.b16 %v709, %v707
        %v784 = vpack.c.b16 %v710, %v708
        %v785 = vpack.c.b16 %v713, %v711
        %v786 = vpack.c.b16 %v714, %v712
        %v787 = vpack.c.b16 %v717, %v715
        %v788 = vpack.c.b16 %v718, %v716
        %v789 = vpack.c.b16 %v721, %v719
        %v790 = vpack.c.b16 %v722, %v720
        %v791 = vpack.c.b16 %v725, %v723
        %v792 = vpack.c.b16 %v726, %v724
        %v793 = vpack.c.b16 %v729, %v727
        %v794 = vpack.c.b16 %v730, %v728
        %859 = vmatpush.bf16.msra.mxu0 %v745
        %860 = vmatpush.bf16.msra.mxu0 %v743
        %861 = vmatpush.bf16.msra.mxu0 %v741
        %862 = vmatpush.bf16.msra.mxu0 %v739
        %863 = vmatpush.bf16.msra.mxu0 %v737
        %864 = vmatpush.bf16.msra.mxu0 %v735
        %865 = vmatpush.bf16.msra.mxu0 %v733
        %866 = vmatpush.bf16.msra.mxu0 %v731
        %867 = vmatmul.bf16.gmra.mxu0 %v471
        %v868 = vpop.f32.mrf.mxu0
        %v869 = vadd.f32 0.0, %v868
        %v870 = vpop.f32.mrf.mxu0
        %871 = vdwg.mxu0
        %872 = vmatpush.bf16.msra.mxu0 %v761
        %873 = vmatpush.bf16.msra.mxu0 %v759
        %874 = vmatpush.bf16.msra.mxu0 %v757
        %875 = vmatpush.bf16.msra.mxu0 %v755
        %876 = vmatpush.bf16.msra.mxu0 %v753
        %877 = vmatpush.bf16.msra.mxu0 %v751
        %878 = vmatpush.bf16.msra.mxu0 %v749
        %879 = vmatpush.bf16.msra.mxu0 %v747
        %880 = vmatmul.bf16.gmra.mxu0 %v472
        %v881 = vpop.f32.mrf.mxu0
        %v882 = vadd.f32 %v869, %v881
        %v883 = vpop.f32.mrf.mxu0
        %884 = vdwg.mxu0
        %885 = vmatpush.bf16.msra.mxu0 %v777
        %886 = vmatpush.bf16.msra.mxu0 %v775
        %887 = vmatpush.bf16.msra.mxu0 %v773
        %888 = vmatpush.bf16.msra.mxu0 %v771
        %889 = vmatpush.bf16.msra.mxu0 %v769
        %890 = vmatpush.bf16.msra.mxu0 %v767
        %891 = vmatpush.bf16.msra.mxu0 %v765
        %892 = vmatpush.bf16.msra.mxu0 %v763
        %893 = vmatmul.bf16.gmra.mxu0 %v473
        %v894 = vpop.f32.mrf.mxu0
        %v895 = vadd.f32 %v882, %v894
        %v896 = vpop.f32.mrf.mxu0
        %897 = vdwg.mxu0
        %898 = vmatpush.bf16.msra.mxu0 %v793
        %899 = vmatpush.bf16.msra.mxu0 %v791
        %900 = vmatpush.bf16.msra.mxu0 %v789
        %901 = vmatpush.bf16.msra.mxu0 %v787
        %902 = vmatpush.bf16.msra.mxu0 %v785
        %903 = vmatpush.bf16.msra.mxu0 %v783
        %904 = vmatpush.bf16.msra.mxu0 %v781
        %905 = vmatpush.bf16.msra.mxu0 %v779
        %906 = vmatmul.bf16.gmra.mxu0 %v474
        %v907 = vpop.f32.mrf.mxu0
        %v908 = vadd.f32 %v895, %v907
        %v909 = vpop.f32.mrf.mxu0
        %910 = vdwg.mxu0
        %911 = vmatpush.bf16.msra.mxu0 %v746
        %912 = vmatpush.bf16.msra.mxu0 %v744
        %913 = vmatpush.bf16.msra.mxu0 %v742
        %914 = vmatpush.bf16.msra.mxu0 %v740
        %915 = vmatpush.bf16.msra.mxu0 %v738
        %916 = vmatpush.bf16.msra.mxu0 %v736
        %917 = vmatpush.bf16.msra.mxu0 %v734
        %918 = vmatpush.bf16.msra.mxu0 %v732
        %919 = vmatmul.bf16.gmra.mxu0 %v471
        %v920 = vpop.f32.mrf.mxu0
        %v921 = vadd.f32 0.0, %v920
        %v922 = vpop.f32.mrf.mxu0
        %923 = vdwg.mxu0
        %924 = vmatpush.bf16.msra.mxu0 %v762
        %925 = vmatpush.bf16.msra.mxu0 %v760
        %926 = vmatpush.bf16.msra.mxu0 %v758
        %927 = vmatpush.bf16.msra.mxu0 %v756
        %928 = vmatpush.bf16.msra.mxu0 %v754
        %929 = vmatpush.bf16.msra.mxu0 %v752
        %930 = vmatpush.bf16.msra.mxu0 %v750
        %931 = vmatpush.bf16.msra.mxu0 %v748
        %932 = vmatmul.bf16.gmra.mxu0 %v472
        %v933 = vpop.f32.mrf.mxu0
        %v934 = vadd.f32 %v921, %v933
        %v935 = vpop.f32.mrf.mxu0
        %936 = vdwg.mxu0
        %937 = vmatpush.bf16.msra.mxu0 %v778
        %938 = vmatpush.bf16.msra.mxu0 %v776
        %939 = vmatpush.bf16.msra.mxu0 %v774
        %940 = vmatpush.bf16.msra.mxu0 %v772
        %941 = vmatpush.bf16.msra.mxu0 %v770
        %942 = vmatpush.bf16.msra.mxu0 %v768
        %943 = vmatpush.bf16.msra.mxu0 %v766
        %944 = vmatpush.bf16.msra.mxu0 %v764
        %945 = vmatmul.bf16.gmra.mxu0 %v473
        %v946 = vpop.f32.mrf.mxu0
        %v947 = vadd.f32 %v934, %v946
        %v948 = vpop.f32.mrf.mxu0
        %949 = vdwg.mxu0
        %950 = vmatpush.bf16.msra.mxu0 %v794
        %951 = vmatpush.bf16.msra.mxu0 %v792
        %952 = vmatpush.bf16.msra.mxu0 %v790
        %953 = vmatpush.bf16.msra.mxu0 %v788
        %954 = vmatpush.bf16.msra.mxu0 %v786
        %955 = vmatpush.bf16.msra.mxu0 %v784
        %956 = vmatpush.bf16.msra.mxu0 %v782
        %957 = vmatpush.bf16.msra.mxu0 %v780
        %958 = vmatmul.bf16.gmra.mxu0 %v474
        %v959 = vpop.f32.mrf.mxu0
        %v960 = vadd.f32 %v947, %v959
        %v961 = vpop.f32.mrf.mxu0
        %962 = vdwg.mxu0
        %v963 = vxor.u32 %v908, 2147483648
        %v964 = vxor.u32 %v960, 2147483648
        %v965 = vmul.f32 %v963, 1.442695
        %v966 = vpow.pop %v965
        %v967 = vmul.f32 %v964, 1.442695
        %v968 = vpow.pop %v967
        %v969 = vadd.f32 %v966, 1.0
        %v970 = vadd.f32 %v968, 1.0
        %v971 = vrcp.pop %v969
        %v972 = vmul.f32 %v969, %v971
        %v973 = vsub.f32 1.0, %v972
        %v974 = vmul.f32 %v971, %v973
        %v975 = vadd.f32 %v971, %v974
        %vm976 = vweird.f32 %v969
        %vm977 = vweird.f32 %v971
        %vm978 = vmor %vm976, %vm977
        %v979 = vsel %vm978, %v971, %v975
        %v980 = vand.u32 2147483647, %v969
        %vm981 = vcmp.eq.f32.partialorder %v980, 8.507059e+37
        %v982 = vand.u32 %v969, 2147483648
        %v983 = vor.u32 1.1754944e-38, %v982
        %v984 = vsel %vm981, %v983, %v979
        %v985 = vmul.f32 1.0, %v984
        %v986 = vrcp.pop %v970
        %v987 = vmul.f32 %v970, %v986
        %v988 = vsub.f32 1.0, %v987
        %v989 = vmul.f32 %v986, %v988
        %v990 = vadd.f32 %v986, %v989
        %vm991 = vweird.f32 %v970
        %vm992 = vweird.f32 %v986
        %vm993 = vmor %vm991, %vm992
        %v994 = vsel %vm993, %v986, %v990
        %v995 = vand.u32 2147483647, %v970
        %vm996 = vcmp.eq.f32.partialorder %v995, 8.507059e+37
        %v997 = vand.u32 %v970, 2147483648
        %v998 = vor.u32 1.1754944e-38, %v997
        %v999 = vsel %vm996, %v998, %v994
        %v1000 = vmul.f32 1.0, %v999
        %v1001 = vperm.slane %v985, 0
        %v1002 = vperm.slane %v1000, 0
        %v1003 = vmul.f32 %v418, %v1001
        %v1004 = vmul.f32 %v419, %v1002
        %v1005 = vmul.f32 %v420, %v1001
        %v1006 = vmul.f32 %v421, %v1002
        %v1007 = vmul.f32 %v422, %v1001
        %v1008 = vmul.f32 %v423, %v1002
        %v1009 = vmul.f32 %v424, %v1001
        %v1010 = vmul.f32 %v425, %v1002
        %1011 = vst [vmem:[%s234] sm:$0xff] %v1003
        %1012 = vst [vmem:[%s234 + $0x8] sm:$0xff] %v1004
        %1013 = vst [vmem:[%s234 + $0x10] sm:$0xff] %v1005
        %1014 = vst [vmem:[%s234 + $0x18] sm:$0xff] %v1006
        %1015 = vst [vmem:[%s234 + $0x20] sm:$0xff] %v1007
        %1016 = vst [vmem:[%s234 + $0x28] sm:$0xff] %v1008
        %1017 = vst [vmem:[%s234 + $0x30] sm:$0xff] %v1009
        %1018 = vst [vmem:[%s234 + $0x38] sm:$0xff] %v1010
        %s1019 = sand.u32 %s119, 1
        %s1020 = scalar_lea.sflag [#allocation4], %s1019
        %s1021 = sand.u32 %s119, 1
        %s1022 = smul.addr %s1021, 64
        %s1023 = scalar_lea.vmem [#allocation7], %s1022
        // Predicated region
        $region45: #{tpu_custom_call.1} parent=35 // pred_check
          %p1024 = pneg %p129
        $region46: #{tpu_custom_call.1} parent=35 // pred_check_branch
          %1026 = sbr.rel (%p1024) target = $region48
        $region47: #{tpu_custom_call.1} parent=35 // pred_region
          %1028 = vsyncadd %s1020, 0
          %s1029 = smul.addr %s22, 8
          %s1030 = smul.addr %s1029, 8
          %s1031 = scalar_lea.hbm %s4, %s1030
          %s1032 = sshll.u32 %s1023, 4
          %s1033 = int_to_ptr.vmem [resolvable:$true] %s1032
          %s1034 = sshll.u32 %s1031, 4
          %s1035 = int_to_ptr.hbm [resolvable:$true] %s1034
          %1040 = dma.vmem_to_hbm [thread:$0]  %s1033, 1024, %s1035, %s1020, 256, 256, 16
        $region48: #{tpu_custom_call.1} parent=35 // pred_fallthru
          _
      $region36: #{tpu_custom_call.1} parent=5 // pred_fallthru
        _
      %p1041 = scmp.le.s32.totalorder 2, %s17
      // Predicated region
      $region49: #{tpu_custom_call.1} parent=5 // pred_check
        %p1042 = pneg %p1041
      $region50: #{tpu_custom_call.1} parent=5 // pred_check_branch
        %1044 = sbr.rel (%p1042) target = $region52
      $region51: #{tpu_custom_call.1} parent=5 // pred_region
        %s1045 = ssub.s32 %s17, 2
        // Predicated region
        $region53: #{tpu_custom_call.1} parent=51 // pred_check
          %p1046 = pneg %p135
        $region54: #{tpu_custom_call.1} parent=51 // pred_check_branch
          %1048 = sbr.rel (%p1046) target = $region56
        $region55: #{tpu_custom_call.1} parent=51 // pred_region
          %s1049 = sand.u32 %s120, 1
          %s1050 = scalar_lea.sflag [#allocation4], %s1049
          %s1051 = sand.u32 %s120, 1
          %s1052 = smul.addr %s1051, 64
          %s1053 = scalar_lea.vmem [#allocation7], %s1052
          %1055 = dma.done %s1050, 1024
        $region56: #{tpu_custom_call.1} parent=51 // pred_fallthru
          _
      $region52: #{tpu_custom_call.1} parent=5 // pred_fallthru
        _
    $region6: #{tpu_custom_call.1} parent=1 // loop_footer
      %s21 = sadd.s32 1, %s17
    $region7: #{tpu_custom_call.1} parent=1 // loop_footer_branch
      %16 = sbr.rel target = $region3
    $region8: #{tpu_custom_call.1} parent=1 // loop_exit
      _
    %1056 = vsyncpa [#allocation3], 1
    %s1057 = scalar_lea.sflag [#allocation3], 1
    %1058 = vsyncpa %s1057, 1
    %1059 = vsyncpa [#allocation6], 1
    %1060 = vsyncpa [#allocation4], 1
    %s1061 = scalar_lea.sflag [#allocation4], 1
    %1062 = vsyncpa %s1061, 1

</llo_original>
